<compile_context>
chip_gen: v5e
topology: v5e:2x2
jax: 0.10.0
libtpu: 0.0.40
codegen_flags: <defaults>
</compile_context>

<pallas_src>
import jax
import jax.numpy as jnp
from jax.experimental import pallas as pl
from jax.experimental.pallas import tpu as pltpu

LANE = 128  # TPU lane width


def mlp_kernel(x_ref, w1_ref, b1_ref, w2_ref, b2_ref, w3_ref, b3_ref, o_ref):
    # Batch-on-lanes: x_ref is (8, TILE_B); each layer is W @ X + b with the
    # tiny feature dims on sublanes and the batch on the 128 lanes.
    x = x_ref[...]

    h1 = jax.nn.sigmoid(
        jnp.dot(w1_ref[...], x, preferred_element_type=jnp.float32) + b1_ref[...]
    )  # (12, TILE_B)
    h2 = jax.nn.sigmoid(
        jnp.dot(w2_ref[...], h1, preferred_element_type=jnp.float32) + b2_ref[...]
    )  # (6, TILE_B)
    y = jax.nn.sigmoid(
        jnp.dot(w3_ref[...], h2, preferred_element_type=jnp.float32) + b3_ref[...]
    )  # (1, TILE_B)

    o_ref[...] = y.astype(o_ref.dtype)


def mlp_forward(x, params, *, tile_b=2048):
    """x: (B, 8) float32 -> (B, 1) float32."""
    w1, b1, w2, b2, w3, b3 = params
    B, f_in = x.shape
    assert f_in == 8

    # Pad the batch to a lane-aligned multiple of the batch tile, then flip to
    # the batch-on-lanes layout (features on sublanes, batch on lanes).
    b_pad = ((B + LANE - 1) // LANE) * LANE
    tile_b = min(tile_b, b_pad)
    n_tiles = pl.cdiv(b_pad, tile_b)
    b_pad = n_tiles * tile_b
    x_t = jnp.pad(x, ((0, b_pad - B), (0, 0))).T  # (8, b_pad)

    # Weights / biases: constant index_map -> VMEM-resident across grid steps.
    fixed = lambda shape: pl.BlockSpec(shape, lambda i: (0, 0))

    out = pl.pallas_call(
        mlp_kernel,
        out_shape=jax.ShapeDtypeStruct((1, b_pad), jnp.float32),
        grid=(n_tiles,),
        in_specs=[
            pl.BlockSpec((8, tile_b), lambda i: (0, i)),   # x tile (streamed)
            fixed(w1.shape), fixed(b1.shape),
            fixed(w2.shape), fixed(b2.shape),
            fixed(w3.shape), fixed(b3.shape),
        ],
        out_specs=pl.BlockSpec((1, tile_b), lambda i: (0, i)),
        compiler_params=pltpu.CompilerParams(
            dimension_semantics=("parallel",),  # shard batch across TCs (v7x)
        ),
        cost_estimate=pl.CostEstimate(
            flops=2 * (8 * 12 + 12 * 6 + 6 * 1) * b_pad,
            transcendentals=(12 + 6 + 1) * b_pad,
            bytes_accessed=(8 * 4 + 4) * b_pad + 4 * (12 * 9 + 6 * 13 + 1 * 7),
        ),
    )(x_t, w1, b1, w2, b2, w3, b3)

    # Back to the PyTorch-facing (B, 1) shape, dropping batch padding.
    return out[0, :B].reshape(B, 1)


def init_params(key):
    """Deterministic init mimicking torch.nn.Linear's U(-1/sqrt(fan_in), ...).

    Weights are stored in PyTorch layout (out_features, in_features);
    biases as (out_features, 1) for the batch-on-lanes kernel layout."""
    dims = [(8, 12), (12, 6), (6, 1)]
    params = []
    for i, (fan_in, fan_out) in enumerate(dims):
        kw, kb = jax.random.split(jax.random.fold_in(key, i))
        bound = 1.0 / jnp.sqrt(jnp.float32(fan_in))
        w = jax.random.uniform(kw, (fan_out, fan_in), jnp.float32, -bound, bound)
        b = jax.random.uniform(kb, (fan_out, 1), jnp.float32, -bound, bound)
        params += [w, b]
    return tuple(params)


def reference_forward(x, params):
    w1, b1, w2, b2, w3, b3 = params
    h1 = jax.nn.sigmoid(x @ w1.T + b1.T)
    h2 = jax.nn.sigmoid(h1 @ w2.T + b2.T)
    return jax.nn.sigmoid(h2 @ w3.T + b3.T)


if __name__ == "__main__":
    key = jax.random.PRNGKey(0)
    kx, kx2, kp = jax.random.split(key, 3)
    params = init_params(kp)

    # Small batch (as in the original module usage).
    batch = 8
    x = jax.random.normal(kx, (batch, 8), dtype=jnp.float32)
    y = jax.block_until_ready(mlp_forward(x, params))
    y_ref = reference_forward(x, params)
    assert y.shape == (batch, 1)
    assert jnp.allclose(y, y_ref, atol=1e-5, rtol=1e-5), "mismatch vs reference (B=8)"

    # Non-lane-multiple batch to exercise the pad/slice path.
    batch2 = 200
    x2 = jax.random.normal(kx2, (batch2, 8), dtype=jnp.float32)
    y2 = jax.block_until_ready(mlp_forward(x2, params))
    y2_ref = reference_forward(x2, params)
    assert y2.shape == (batch2, 1)
    assert jnp.allclose(y2, y2_ref, atol=1e-5, rtol=1e-5), "mismatch vs reference (B=200)"

    print("KERNEL_OK")
</pallas_src>

<mosaic_0001>
module attributes {stable_mosaic.version = 11 : i64} {
  func.func @mlp_kernel(%arg0: i32, %arg1: memref<8x128xf32, #tpu.memory_space<vmem>>, %arg2: memref<12x8xf32, #tpu.memory_space<vmem>>, %arg3: memref<12x1xf32, #tpu.memory_space<vmem>>, %arg4: memref<6x12xf32, #tpu.memory_space<vmem>>, %arg5: memref<6x1xf32, #tpu.memory_space<vmem>>, %arg6: memref<1x6xf32, #tpu.memory_space<vmem>>, %arg7: memref<1x1xf32, #tpu.memory_space<vmem>>, %arg8: memref<1x128xf32, #tpu.memory_space<vmem>>) attributes {dimension_semantics = [#tpu.dimension_semantics<parallel>], iteration_bounds = array<i64: 1>, scalar_prefetch = 0 : i64, scratch_operands = 0 : i64, tpu.core_type = #tpu.core_type<tc>, window_params = [{transform_indices = @transform_0, window_bounds = array<i64: 8, 128>}, {pipeline_mode = #tpu.pipeline_mode<synchronous>, transform_indices = @transform_1, window_bounds = array<i64: 12, 8>}, {pipeline_mode = #tpu.pipeline_mode<synchronous>, transform_indices = @transform_2, window_bounds = array<i64: 12, 1>}, {pipeline_mode = #tpu.pipeline_mode<synchronous>, transform_indices = @transform_3, window_bounds = array<i64: 6, 12>}, {pipeline_mode = #tpu.pipeline_mode<synchronous>, transform_indices = @transform_4, window_bounds = array<i64: 6, 1>}, {pipeline_mode = #tpu.pipeline_mode<synchronous>, transform_indices = @transform_5, window_bounds = array<i64: 1, 6>}, {pipeline_mode = #tpu.pipeline_mode<synchronous>, transform_indices = @transform_6, window_bounds = array<i64: 1, 1>}, {transform_indices = @transform_7, window_bounds = array<i64: 1, 128>}]} {
    %c0 = arith.constant 0 : index
    %c0_0 = arith.constant 0 : index
    %0 = vector.load %arg1[%c0, %c0_0] : memref<8x128xf32, #tpu.memory_space<vmem>>, vector<8x128xf32>
    %c0_1 = arith.constant 0 : index
    %c0_2 = arith.constant 0 : index
    %1 = vector.load %arg2[%c0_1, %c0_2] : memref<12x8xf32, #tpu.memory_space<vmem>>, vector<12x8xf32>
    %cst = arith.constant dense<0.000000e+00> : vector<12x128xf32>
    %2 = tpu.matmul %1, %0, %cst {dimension_numbers = #tpu.dot_dimension_numbers<[1], [0], [0], [1], [0, 0, 1, 1], [], []>} : vector<12x8xf32>, vector<8x128xf32>, vector<12x128xf32> -> vector<12x128xf32>
    %c0_3 = arith.constant 0 : index
    %c0_4 = arith.constant 0 : index
    %3 = vector.load %arg3[%c0_3, %c0_4] : memref<12x1xf32, #tpu.memory_space<vmem>>, vector<12x1xf32>
    %4 = vector.broadcast %3 : vector<12x1xf32> to vector<12x128xf32>
    %5 = arith.addf %2, %4 : vector<12x128xf32>
    %6 = arith.negf %5 : vector<12x128xf32>
    %7 = math.exp %6 : vector<12x128xf32>
    %cst_5 = arith.constant 1.000000e+00 : f32
    %8 = vector.broadcast %cst_5 : f32 to vector<12x128xf32>
    %9 = arith.addf %8, %7 : vector<12x128xf32>
    %10 = arith.divf %8, %9 : vector<12x128xf32>
    %c0_6 = arith.constant 0 : index
    %c0_7 = arith.constant 0 : index
    %11 = vector.load %arg4[%c0_6, %c0_7] : memref<6x12xf32, #tpu.memory_space<vmem>>, vector<6x12xf32>
    %cst_8 = arith.constant dense<0.000000e+00> : vector<6x128xf32>
    %12 = tpu.matmul %11, %10, %cst_8 {dimension_numbers = #tpu.dot_dimension_numbers<[1], [0], [0], [1], [0, 0, 1, 1], [], []>} : vector<6x12xf32>, vector<12x128xf32>, vector<6x128xf32> -> vector<6x128xf32>
    %c0_9 = arith.constant 0 : index
    %c0_10 = arith.constant 0 : index
    %13 = vector.load %arg5[%c0_9, %c0_10] : memref<6x1xf32, #tpu.memory_space<vmem>>, vector<6x1xf32>
    %14 = vector.broadcast %13 : vector<6x1xf32> to vector<6x128xf32>
    %15 = arith.addf %12, %14 : vector<6x128xf32>
    %16 = arith.negf %15 : vector<6x128xf32>
    %17 = math.exp %16 : vector<6x128xf32>
    %cst_11 = arith.constant 1.000000e+00 : f32
    %18 = vector.broadcast %cst_11 : f32 to vector<6x128xf32>
    %19 = arith.addf %18, %17 : vector<6x128xf32>
    %20 = arith.divf %18, %19 : vector<6x128xf32>
    %c0_12 = arith.constant 0 : index
    %c0_13 = arith.constant 0 : index
    %21 = vector.load %arg6[%c0_12, %c0_13] : memref<1x6xf32, #tpu.memory_space<vmem>>, vector<1x6xf32>
    %cst_14 = arith.constant dense<0.000000e+00> : vector<1x128xf32>
    %22 = tpu.matmul %21, %20, %cst_14 {dimension_numbers = #tpu.dot_dimension_numbers<[1], [0], [0], [1], [0, 0, 1, 1], [], []>} : vector<1x6xf32>, vector<6x128xf32>, vector<1x128xf32> -> vector<1x128xf32>
    %c0_15 = arith.constant 0 : index
    %c0_16 = arith.constant 0 : index
    %23 = vector.load %arg7[%c0_15, %c0_16] : memref<1x1xf32, #tpu.memory_space<vmem>>, vector<1x1xf32>
    %24 = vector.broadcast %23 : vector<1x1xf32> to vector<1x128xf32>
    %25 = arith.addf %22, %24 : vector<1x128xf32>
    %26 = arith.negf %25 : vector<1x128xf32>
    %27 = math.exp %26 : vector<1x128xf32>
    %cst_17 = arith.constant 1.000000e+00 : f32
    %28 = vector.broadcast %cst_17 : f32 to vector<1x128xf32>
    %29 = arith.addf %28, %27 : vector<1x128xf32>
    %30 = arith.divf %28, %29 : vector<1x128xf32>
    %c0_18 = arith.constant 0 : index
    %c0_19 = arith.constant 0 : index
    %31 = vector.load %arg8[%c0_18, %c0_19] : memref<1x128xf32, #tpu.memory_space<vmem>>, vector<1x128xf32>
    tpu.vector_store %arg8[%c0_18, %c0_19], %30 {strides = array<i32>} : memref<1x128xf32, #tpu.memory_space<vmem>>, vector<1x128xf32>,
    return
  }
  func.func @transform_0(%arg0: i32) -> (i32, i32) {
    %c0_i32 = arith.constant 0 : i32
    %c0_i32_0 = arith.constant 0 : i32
    return %c0_i32, %arg0 : i32, i32
  }
  func.func @transform_1(%arg0: i32) -> (i32, i32) {
    %c0_i32 = arith.constant 0 : i32
    %c0_i32_0 = arith.constant 0 : i32
    %c0_i32_1 = arith.constant 0 : i32
    return %c0_i32, %c0_i32_0 : i32, i32
  }
  func.func @transform_2(%arg0: i32) -> (i32, i32) {
    %c0_i32 = arith.constant 0 : i32
    %c0_i32_0 = arith.constant 0 : i32
    %c0_i32_1 = arith.constant 0 : i32
    return %c0_i32, %c0_i32_0 : i32, i32
  }
  func.func @transform_3(%arg0: i32) -> (i32, i32) {
    %c0_i32 = arith.constant 0 : i32
    %c0_i32_0 = arith.constant 0 : i32
    %c0_i32_1 = arith.constant 0 : i32
    return %c0_i32, %c0_i32_0 : i32, i32
  }
  func.func @transform_4(%arg0: i32) -> (i32, i32) {
    %c0_i32 = arith.constant 0 : i32
    %c0_i32_0 = arith.constant 0 : i32
    %c0_i32_1 = arith.constant 0 : i32
    return %c0_i32, %c0_i32_0 : i32, i32
  }
  func.func @transform_5(%arg0: i32) -> (i32, i32) {
    %c0_i32 = arith.constant 0 : i32
    %c0_i32_0 = arith.constant 0 : i32
    %c0_i32_1 = arith.constant 0 : i32
    return %c0_i32, %c0_i32_0 : i32, i32
  }
  func.func @transform_6(%arg0: i32) -> (i32, i32) {
    %c0_i32 = arith.constant 0 : i32
    %c0_i32_0 = arith.constant 0 : i32
    %c0_i32_1 = arith.constant 0 : i32
    return %c0_i32, %c0_i32_0 : i32, i32
  }
  func.func @transform_7(%arg0: i32) -> (i32, i32) {
    %c0_i32 = arith.constant 0 : i32
    %c0_i32_0 = arith.constant 0 : i32
    return %c0_i32, %arg0 : i32, i32
  }
}

</mosaic_0001>

<llo_original>
// kernel: tpu_custom_call.1
$region0: #{tpu_custom_call.1}
  #allocation0 [shape = 'u32[]', space=smem, size = 0x4, offset = 0x4, fixed_abs, tag = 'smem constant byte address 0x4 - core index']
  #allocation1 [shape = 'u32[72,128]{1,0:T(1,128)}', space=vmem, size = 0x9000, scoped, tag = 'internal scratch']
  #allocation2 [shape = 'f32[1,1]{1,0:T(1,128)S(1)}', space=vmem, size = 0x200, scoped, tag = 'scoped memory for tpu_custom_call.1']
  %s0 = inlined_call_operand.vmem [shape: f32[8,128], index: 0, kind: input, shape index: {}]
  %s1 = inlined_call_operand.vmem [shape: f32[12,8], index: 1, kind: input, shape index: {}]
  %s2 = inlined_call_operand.vmem [shape: f32[12,1], index: 2, kind: input, shape index: {}]
  %s3 = inlined_call_operand.vmem [shape: f32[6,12], index: 3, kind: input, shape index: {}]
  %s4 = inlined_call_operand.vmem [shape: f32[6,1], index: 4, kind: input, shape index: {}]
  %s5 = inlined_call_operand.vmem [shape: f32[1,6], index: 5, kind: input, shape index: {}]
  %s6 = inlined_call_operand.<no memory space> [shape: f32[1,1], index: 6, kind: input, shape index: {}]
  %s7 = inlined_call_operand.hbm [shape: f32[1,128], index: 7, kind: output, shape index: {}]
  %s8 = sld [smem:[#allocation0]]
  $region38: #{tpu_custom_call.1} parent=0
    _
  %s10 = ssub.s32 1, %s8
  %s11 = scalar_select 0, %s10, %s8
  %v12 = vstv %s6
  %13 = vst [vmem:[#allocation2] sm:$0x1] %v12
  $region1: #{tpu_custom_call.1} parent=0
    #allocation3 [shape = 'u8[512]{0}', space=vmem, size = 0x400, scoped, tag = 'output window, operand 0, single buffered']
    #allocation4 [shape = 's32[1]{0}', space=sflag, size = 0x4, scoped, tag = 'scoped memory for tpu_custom_call.1']
    %14 = vsyncpa [#allocation4], 0
    // Predicated region
    $region2: #{tpu_custom_call.1} parent=1 // pred_check
      _
    $region3: #{tpu_custom_call.1} parent=1 // pred_check_branch
      %16 = sbr.rel (0) target = $region5
    $region4: #{tpu_custom_call.1} parent=1 // pred_region
      _
    $region5: #{tpu_custom_call.1} parent=1 // pred_fallthru
      _
    // Predicated region
    $region6: #{tpu_custom_call.1} parent=1 // pred_check
      _
    $region7: #{tpu_custom_call.1} parent=1 // pred_check_branch
      %18 = sbr.rel (0) target = $region9
    $region8: #{tpu_custom_call.1} parent=1 // pred_region
      _
    $region9: #{tpu_custom_call.1} parent=1 // pred_fallthru
      _
    // Predicated region
    $region10: #{tpu_custom_call.1} parent=1 // pred_check
      _
    $region11: #{tpu_custom_call.1} parent=1 // pred_check_branch
      %20 = sbr.rel (0) target = $region13
    $region12: #{tpu_custom_call.1} parent=1 // pred_region
      _
    $region13: #{tpu_custom_call.1} parent=1 // pred_fallthru
      _
    // Predicated region
    $region14: #{tpu_custom_call.1} parent=1 // pred_check
      _
    $region15: #{tpu_custom_call.1} parent=1 // pred_check_branch
      %22 = sbr.rel (0) target = $region17
    $region16: #{tpu_custom_call.1} parent=1 // pred_region
      _
    $region17: #{tpu_custom_call.1} parent=1 // pred_fallthru
      _
    // Predicated region
    $region18: #{tpu_custom_call.1} parent=1 // pred_check
      _
    $region19: #{tpu_custom_call.1} parent=1 // pred_check_branch
      %24 = sbr.rel (0) target = $region21
    $region20: #{tpu_custom_call.1} parent=1 // pred_region
      _
    $region21: #{tpu_custom_call.1} parent=1 // pred_fallthru
      _
    // Predicated region
    $region22: #{tpu_custom_call.1} parent=1 // pred_check
      _
    $region23: #{tpu_custom_call.1} parent=1 // pred_check_branch
      %26 = sbr.rel (0) target = $region25
    $region24: #{tpu_custom_call.1} parent=1 // pred_region
      _
    $region25: #{tpu_custom_call.1} parent=1 // pred_fallthru
      _
    // Predicated region
    $region26: #{tpu_custom_call.1} parent=1 // pred_check
      _
    $region27: #{tpu_custom_call.1} parent=1 // pred_check_branch
      %28 = sbr.rel (0) target = $region29
    $region28: #{tpu_custom_call.1} parent=1 // pred_region
      _
    $region29: #{tpu_custom_call.1} parent=1 // pred_fallthru
      _
    %v29 = vld [vmem:[%s0] sm:$0xff]
    %v30 = vld [vmem:[%s1] sm:$0xff]
    %v31 = vld [vmem:[%s1 + $0x8] sm:$0xf]
    %v32 = vld [vmem:[%s2] sm:$0xff]
    %v33 = vld [vmem:[%s2 + $0x8] sm:$0xf]
    %35 = vset.pattern.permute.xlu0 0
    %36 = vperm.xlu0 %35, %v32
    %v37 = vpop.permute.xlu0 %36
    %40 = vset.pattern.permute.xlu0 0
    %41 = vperm.xlu0 %40, %v33
    %v42 = vpop.permute.xlu0 %41
    %vm44 = vcmask 64512
    %v46 = vsel %vm44, %v30, 0
    %v49 = vsel %vm44, %v31, 0
    %51 = vmatpush.msra.mxu0 0.0
    %52 = vmatpush.msra.mxu0 0.0
    %53 = vmatpush.msra.mxu0 0.0
    %54 = vmatpush.msra.mxu0 0.0
    %55 = vmatpush.msra.mxu0 0.0
    %56 = vmatpush.msra.mxu0 0.0
    %57 = vmatpush.msra.mxu0 0.0
    %58 = vmatpush.msra.mxu0 0.0
    %59 = vmatpush.msra.mxu0 0.0
    %60 = vmatpush.msra.mxu0 0.0
    %61 = vmatpush.msra.mxu0 0.0
    %62 = vmatpush.msra.mxu0 0.0
    %63 = vmatpush.msra.mxu0 0.0
    %64 = vmatpush.msra.mxu0 0.0
    %65 = vmatpush.msra.mxu0 0.0
    %66 = vmatpush.msra.mxu0 %v29
    %67 = vmatmul.f32.gmra.mxu0 %v46
    %v68 = vpop.f32.mrf.mxu0
    %v69 = vadd.f32 %v37, %v68
    %70 = vmatmul.f32.gmra.mxu0 %v49
    %v71 = vpop.f32.mrf.mxu0
    %v72 = vadd.f32 %v42, %v71
    %73 = vdwg.mxu0
    %v74 = vxor.u32 %v69, 2147483648
    %v75 = vxor.u32 %v72, 2147483648
    %v76 = vmul.f32 %v74, 1.442695
    %v77 = vpow.pop %v76
    %v78 = vmul.f32 %v75, 1.442695
    %v79 = vpow.pop %v78
    %v80 = vadd.f32 %v77, 1.0
    %v81 = vadd.f32 %v79, 1.0
    %v82 = vrcp.pop %v80
    %v83 = vmul.f32 %v80, %v82
    %v84 = vsub.f32 1.0, %v83
    %v85 = vmul.f32 %v82, %v84
    %v86 = vadd.f32 %v82, %v85
    %vm87 = vweird.f32 %v80
    %vm88 = vweird.f32 %v82
    %vm89 = vmor %vm87, %vm88
    %v90 = vsel %vm89, %v82, %v86
    %v91 = vand.u32 2147483647, %v80
    %vm92 = vcmp.eq.f32.partialorder %v91, 8.507059e+37
    %v93 = vand.u32 %v80, 2147483648
    %v94 = vor.u32 1.1754944e-38, %v93
    %v95 = vsel %vm92, %v94, %v90
    %v96 = vmul.f32 1.0, %v95
    %v97 = vrcp.pop %v81
    %v98 = vmul.f32 %v81, %v97
    %v99 = vsub.f32 1.0, %v98
    %v100 = vmul.f32 %v97, %v99
    %v101 = vadd.f32 %v97, %v100
    %vm102 = vweird.f32 %v81
    %vm103 = vweird.f32 %v97
    %vm104 = vmor %vm102, %vm103
    %v105 = vsel %vm104, %v97, %v101
    %v106 = vand.u32 2147483647, %v81
    %vm107 = vcmp.eq.f32.partialorder %v106, 8.507059e+37
    %v108 = vand.u32 %v81, 2147483648
    %v109 = vor.u32 1.1754944e-38, %v108
    %v110 = vsel %vm107, %v109, %v105
    %v111 = vmul.f32 1.0, %v110
    %v112 = vld [vmem:[%s3] sm:$0x3f]
    %v113 = vld [vmem:[%s4] sm:$0x3f]
    %115 = vset.pattern.permute.xlu0 0
    %116 = vperm.xlu0 %115, %v113
    %v117 = vpop.permute.xlu0 %116
    %vm119 = vcmask 97280
    %v121 = vsel %vm119, %v112, 0
    %vm123 = vcmask 1043456
    %v125 = vsel %vm123, %v111, 0
    %127 = vmatpush.msra.mxu0 0.0
    %128 = vmatpush.msra.mxu0 0.0
    %129 = vmatpush.msra.mxu0 0.0
    %130 = vmatpush.msra.mxu0 0.0
    %131 = vmatpush.msra.mxu0 0.0
    %132 = vmatpush.msra.mxu0 0.0
    %133 = vmatpush.msra.mxu0 0.0
    %134 = vmatpush.msra.mxu0 0.0
    %135 = vmatpush.msra.mxu0 0.0
    %136 = vmatpush.msra.mxu0 0.0
    %137 = vmatpush.msra.mxu0 0.0
    %138 = vmatpush.msra.mxu0 0.0
    %139 = vmatpush.msra.mxu0 0.0
    %140 = vmatpush.msra.mxu0 0.0
    %141 = vmatpush.msra.mxu0 %v125
    %142 = vmatpush.msra.mxu0 %v96
    %143 = vmatmul.f32.gmra.mxu0 %v121
    %v144 = vpop.f32.mrf.mxu0
    %v145 = vadd.f32 %v117, %v144
    %146 = vdwg.mxu0
    %v147 = vxor.u32 %v145, 2147483648
    %v148 = vmul.f32 %v147, 1.442695
    %v149 = vpow.pop %v148
    %v150 = vadd.f32 %v149, 1.0
    %v151 = vrcp.pop %v150
    %v152 = vmul.f32 %v150, %v151
    %v153 = vsub.f32 1.0, %v152
    %v154 = vmul.f32 %v151, %v153
    %v155 = vadd.f32 %v151, %v154
    %vm156 = vweird.f32 %v150
    %vm157 = vweird.f32 %v151
    %vm158 = vmor %vm156, %vm157
    %v159 = vsel %vm158, %v151, %v155
    %v160 = vand.u32 2147483647, %v150
    %vm161 = vcmp.eq.f32.partialorder %v160, 8.507059e+37
    %v162 = vand.u32 %v150, 2147483648
    %v163 = vor.u32 1.1754944e-38, %v162
    %v164 = vsel %vm161, %v163, %v159
    %v165 = vmul.f32 1.0, %v164
    %v166 = vld [vmem:[%s5] sm:$0x1]
    %v167 = vld [vmem:[#allocation2] sm:$0x1]
    %169 = vset.pattern.permute.xlu0 0
    %170 = vperm.xlu0 %169, %v167
    %v171 = vpop.permute.xlu0 %170
    %v173 = vperm.slane %v171, 0
    %vm174 = vcmask 48128
    %v176 = vsel %vm174, %v166, 0
    %vm178 = vcmask 1045504
    %v180 = vsel %vm178, %v165, 0
    %182 = vmatpush.msra.mxu0 0.0
    %183 = vmatpush.msra.mxu0 0.0
    %184 = vmatpush.msra.mxu0 0.0
    %185 = vmatpush.msra.mxu0 0.0
    %186 = vmatpush.msra.mxu0 0.0
    %187 = vmatpush.msra.mxu0 0.0
    %188 = vmatpush.msra.mxu0 0.0
    %189 = vmatpush.msra.mxu0 0.0
    %190 = vmatpush.msra.mxu0 0.0
    %191 = vmatpush.msra.mxu0 0.0
    %192 = vmatpush.msra.mxu0 0.0
    %193 = vmatpush.msra.mxu0 0.0
    %194 = vmatpush.msra.mxu0 0.0
    %195 = vmatpush.msra.mxu0 0.0
    %196 = vmatpush.msra.mxu0 0.0
    %197 = vmatpush.msra.mxu0 %v180
    %198 = vmatmul.f32.gmra.mxu0 %v176
    %v199 = vpop.f32.mrf.mxu0
    %v200 = vadd.f32 %v173, %v199
    %201 = vdwg.mxu0
    %v202 = vxor.u32 %v200, 2147483648
    %v203 = vmul.f32 %v202, 1.442695
    %v204 = vpow.pop %v203
    %v205 = vadd.f32 %v204, 1.0
    %v206 = vrcp.pop %v205
    %v207 = vmul.f32 %v205, %v206
    %v208 = vsub.f32 1.0, %v207
    %v209 = vmul.f32 %v206, %v208
    %v210 = vadd.f32 %v206, %v209
    %vm211 = vweird.f32 %v205
    %vm212 = vweird.f32 %v206
    %vm213 = vmor %vm211, %vm212
    %v214 = vsel %vm213, %v206, %v210
    %v215 = vand.u32 2147483647, %v205
    %vm216 = vcmp.eq.f32.partialorder %v215, 8.507059e+37
    %v217 = vand.u32 %v205, 2147483648
    %v218 = vor.u32 1.1754944e-38, %v217
    %v219 = vsel %vm216, %v218, %v214
    %v220 = vmul.f32 1.0, %v219
    %221 = vst [vmem:[#allocation3] sm:$0x1] %v220
    // Predicated region
    $region30: #{tpu_custom_call.1} parent=1 // pred_check
      _
    $region31: #{tpu_custom_call.1} parent=1 // pred_check_branch
      %223 = sbr.rel (0) target = $region33
    $region32: #{tpu_custom_call.1} parent=1 // pred_region
      %225 = vsyncadd [#allocation4], 0
      %s227 = sshll.u32 [#allocation3], 4
      %s228 = int_to_ptr.vmem [resolvable:$true] %s227
      %s229 = sshll.u32 %s7, 4
      %s230 = int_to_ptr.hbm [resolvable:$true] %s229
      %232 = dma.vmem_to_hbm [thread:$0]  %s228, 16, %s230, [#allocation4]
    $region33: #{tpu_custom_call.1} parent=1 // pred_fallthru
      _
    // Predicated region
    $region34: #{tpu_custom_call.1} parent=1 // pred_check
      _
    $region35: #{tpu_custom_call.1} parent=1 // pred_check_branch
      %234 = sbr.rel (0) target = $region37
    $region36: #{tpu_custom_call.1} parent=1 // pred_region
      %236 = dma.done [#allocation4], 16
    $region37: #{tpu_custom_call.1} parent=1 // pred_fallthru
      _
    %237 = vsyncpa [#allocation4], 1

</llo_original>
